<compile_context>
chip_gen: v7x
topology: tpu7x:2x2x1
jax: 0.10.0
libtpu: 0.0.40
codegen_flags: <defaults>
</compile_context>

<pallas_src>
import jax
import jax.numpy as jnp
from jax import lax
from jax.experimental import pallas as pl
from jax.experimental.pallas import tpu as pltpu


def _round_up(x, m):
    return (x + m - 1) // m * m


def _vmem_capacity_bytes():
    """Per-core VMEM capacity; conservative 64 MiB (v7x) fallback."""
    try:
        cap = int(pltpu.get_tpu_info().vmem_capacity_bytes)
        if cap > 0:
            return cap
    except Exception:
        pass
    return 64 << 20


# ---------------------------------------------------------------------------
# Path A: VMEM-resident tables + one-hot MXU gather (small tables only).
# ---------------------------------------------------------------------------
def _mf_onehot_kernel(uids_ref, iids_ref, ufac_ref, ifac_ref, o_ref):
    """One lane-dense batch tile.

    uids_ref, iids_ref : (1, TB) int32      per-tile row indices (batch on lanes)
    ufac_ref           : (nu_p, F) f32      VMEM-resident user table (untransposed)
    ifac_ref           : (ni_p, F) f32      VMEM-resident item table (untransposed)
    o_ref              : (1, TB) f32        lane-dense per-tile output
    """
    nu = ufac_ref.shape[0]
    ni = ifac_ref.shape[0]

    uids = uids_ref[...]  # (1, TB)
    iids = iids_ref[...]  # (1, TB)

    # Narrow iota: a single (n_rows, 1) column; the compare broadcasts it
    # against the (1, TB) ids (saves ~n_rows*TB VPU iota ops per table/tile).
    u_onehot = (
        lax.broadcasted_iota(jnp.int32, (nu, 1), 0) == uids
    ).astype(jnp.float32)  # (nu, TB)
    i_onehot = (
        lax.broadcasted_iota(jnp.int32, (ni, 1), 0) == iids
    ).astype(jnp.float32)  # (ni, TB)

    # Gather via MXU: contract dim 0 of the untransposed (n_rows, F) table with
    # dim 0 of the (n_rows, TB) one-hot -> (F, TB).  No host-side transpose.
    dn = (((0,), (0,)), ((), ()))
    u_tile = lax.dot_general(ufac_ref[...], u_onehot, dn,
                             preferred_element_type=jnp.float32)  # (F, TB)
    i_tile = lax.dot_general(ifac_ref[...], i_onehot, dn,
                             preferred_element_type=jnp.float32)  # (F, TB)

    # Elementwise product (VPU), reduce over the factor/sublane axis (XLU),
    # one unmasked lane-dense (1, TB) store.
    o_ref[...] = jnp.sum(u_tile * i_tile, axis=0, keepdims=True)


def _forward_onehot(users_p, items_p, user_factors, item_factors,
                    B, Bp, TB, num_tiles, vmem_limit):
    n_users, F = user_factors.shape
    n_items = item_factors.shape[0]
    nu_p = _round_up(n_users, 8)
    ni_p = _round_up(n_items, 8)
    # Pad table rows to a sublane multiple; pad rows are never selected
    # (valid ids < n_rows) so they contribute zeros.
    ufac_p = jnp.pad(user_factors, ((0, nu_p - n_users), (0, 0)))
    ifac_p = jnp.pad(item_factors, ((0, ni_p - n_items), (0, 0)))

    cost = pl.CostEstimate(
        flops=2 * F * Bp * (nu_p + ni_p) + 2 * Bp * F,
        transcendentals=0,
        bytes_accessed=4 * F * (nu_p + ni_p) + 4 * 2 * Bp + 4 * Bp,
    )

    out = pl.pallas_call(
        _mf_onehot_kernel,
        out_shape=jax.ShapeDtypeStruct((num_tiles, TB), jnp.float32),
        grid=(num_tiles,),
        in_specs=[
            pl.BlockSpec((1, TB), lambda t: (t, 0)),            # user ids tile
            pl.BlockSpec((1, TB), lambda t: (t, 0)),            # item ids tile
            # Untiled memory-space inputs: copied into VMEM once (not pipelined,
            # i.e. single-buffered by construction).
            pl.BlockSpec(memory_space=pltpu.MemorySpace.VMEM),  # user table
            pl.BlockSpec(memory_space=pltpu.MemorySpace.VMEM),  # item table
        ],
        out_specs=pl.BlockSpec((1, TB), lambda t: (t, 0)),
        compiler_params=pltpu.CompilerParams(
            dimension_semantics=("parallel",),
            vmem_limit_bytes=vmem_limit,
        ),
        cost_estimate=cost,
    )(users_p, items_p, ufac_p, ifac_p)

    return out.reshape(-1)[:B]


# ---------------------------------------------------------------------------
# Path B (primary for realistic sizes): scalar-prefetched ids + manual
# double-buffered DMA row gather from HBM-resident tables.
# ---------------------------------------------------------------------------
def _mf_dma_kernel(uids_ref, iids_ref, ufac_hbm, ifac_hbm, o_ref,
                   u_buf, i_buf, u_sem, i_sem):
    """One batch tile, gathered CH rows at a time with double buffering.

    uids_ref, iids_ref : SMEM (num_tiles, TB) int32   (scalar-prefetched ids)
    ufac_hbm           : (n_users, F) f32 in HBM (memory_space=ANY)
    ifac_hbm           : (n_items, F) f32 in HBM (memory_space=ANY)
    o_ref              : (TB, 1) f32 output block
    u_buf, i_buf       : VMEM (2*CH, F) double-buffered row staging
    u_sem, i_sem       : DMA semaphores (2*CH,)
    """
    t = pl.program_id(0)
    TB = o_ref.shape[0]
    two_ch, _ = u_buf.shape
    CH = two_ch // 2
    n_chunks = TB // CH

    def issue(c, slot):
        base = c * CH
        for r in range(CH):  # static unroll: CH row-DMAs per table per chunk
            b = slot * CH + r
            uid = uids_ref[t, base + r]
            iid = iids_ref[t, base + r]
            pltpu.make_async_copy(ufac_hbm.at[uid], u_buf.at[b], u_sem.at[b]).start()
            pltpu.make_async_copy(ifac_hbm.at[iid], i_buf.at[b], i_sem.at[b]).start()

    # Prime slot 0.
    issue(0, 0)

    def body(c, carry):
        slot = c % 2

        # Wait for this chunk's rows.
        for r in range(CH):
            b = slot * CH + r
            pltpu.make_async_copy(ufac_hbm.at[0], u_buf.at[b], u_sem.at[b]).wait()
            pltpu.make_async_copy(ifac_hbm.at[0], i_buf.at[b], i_sem.at[b]).wait()

        # Prefetch the next chunk into the other slot.
        @pl.when(c + 1 < n_chunks)
        def _():
            issue(c + 1, 1 - slot)

        off = pl.multiple_of(slot * CH, CH)
        u_rows = u_buf[pl.ds(off, CH), :]                 # (CH, F)
        i_rows = i_buf[pl.ds(off, CH), :]                 # (CH, F)
        res = jnp.sum(u_rows * i_rows, axis=1, keepdims=True)  # (CH, 1)

        out_off = pl.multiple_of(c * CH, CH)
        o_ref[pl.ds(out_off, CH), :] = res
        return carry

    lax.fori_loop(0, n_chunks, body, 0)


def _forward_dma(users_p, items_p, user_factors, item_factors,
                 B, Bp, TB, num_tiles, chunk):
    n_users, F = user_factors.shape

    grid_spec = pltpu.PrefetchScalarGridSpec(
        num_scalar_prefetch=2,            # users_p, items_p -> SMEM
        grid=(num_tiles,),
        in_specs=[
            pl.BlockSpec(memory_space=pl.ANY),   # user table stays in HBM
            pl.BlockSpec(memory_space=pl.ANY),   # item table stays in HBM
        ],
        out_specs=pl.BlockSpec((TB, 1), lambda t, uids, iids: (t, 0)),
        scratch_shapes=[
            pltpu.VMEM((2 * chunk, F), jnp.float32),   # user row double-buffer
            pltpu.VMEM((2 * chunk, F), jnp.float32),   # item row double-buffer
            pltpu.SemaphoreType.DMA((2 * chunk,)),
            pltpu.SemaphoreType.DMA((2 * chunk,)),
        ],
    )

    # Memory/latency-bound cost model (no one-hot matmul FLOPs).
    cost = pl.CostEstimate(
        flops=2 * Bp * F,
        transcendentals=0,
        bytes_accessed=2 * Bp * F * 4 + 2 * Bp * 4 + Bp * 4,
    )

    out = pl.pallas_call(
        _mf_dma_kernel,
        out_shape=jax.ShapeDtypeStruct((Bp, 1), jnp.float32),
        grid_spec=grid_spec,
        compiler_params=pltpu.CompilerParams(
            dimension_semantics=("parallel",),
        ),
        cost_estimate=cost,
    )(users_p, items_p, user_factors, item_factors)

    return out.reshape(-1)[:B]


# ---------------------------------------------------------------------------
# Wrapper: tiling, path selection, VMEM budgeting.
# ---------------------------------------------------------------------------
def matrix_factorization_forward(data, user_factors, item_factors, *,
                                 tile_b=1024, path=None,
                                 onehot_max_rows=2048, chunk=8):
    """data: (B, 2) int; user_factors: (n_users, F); item_factors: (n_items, F).

    Returns (B,) float32, matching the PyTorch module's forward().
    path: None (auto), "onehot", or "dma".
    """
    users = data[:, 0].astype(jnp.int32)
    items = data[:, 1].astype(jnp.int32)
    B = users.shape[0]
    n_users, F = user_factors.shape
    n_items = item_factors.shape[0]
    user_factors = user_factors.astype(jnp.float32)
    item_factors = item_factors.astype(jnp.float32)

    # Lane-dense batch tiles (multiple of 128); for B >= 256 force >= 2 tiles
    # so the "parallel" grid axis can use both v7x TensorCores.
    TB = min(_round_up(B, 128), _round_up(tile_b, 128))
    if B >= 256:
        TB = min(TB, _round_up((B + 1) // 2, 128))
    Bp = _round_up(B, TB)
    num_tiles = Bp // TB

    pad = Bp - B
    users_p = jnp.pad(users, (0, pad)).reshape(num_tiles, TB)   # pad ids -> row 0
    items_p = jnp.pad(items, (0, pad)).reshape(num_tiles, TB)

    # VMEM budget for the resident one-hot path (per-core capacity, 85% cap so
    # v7x's 64 MiB is never exceeded).
    cap = _vmem_capacity_bytes()
    budget = int(cap * 0.85)
    nu_p = _round_up(n_users, 8)
    ni_p = _round_up(n_items, 8)
    table_bytes = 4 * F * (nu_p + ni_p)
    onehot_bytes = 4 * TB * (nu_p + ni_p)      # f32 one-hot working set
    tile_bytes = 4 * TB * 8                     # id + output tiles (buffered)
    needed = table_bytes + onehot_bytes + 2 * tile_bytes + (4 << 20)

    if path is None:
        small = max(n_users, n_items) <= onehot_max_rows
        path = "onehot" if (small and needed <= budget) else "dma"

    if path == "onehot":
        vmem_limit = int(min(max(needed, 32 << 20), budget))
        return _forward_onehot(users_p, items_p, user_factors, item_factors,
                               B, Bp, TB, num_tiles, vmem_limit)
    return _forward_dma(users_p, items_p, user_factors, item_factors,
                        B, Bp, TB, num_tiles, chunk)


def _reference_forward(data, user_factors, item_factors):
    users = data[:, 0]
    items = data[:, 1]
    return jnp.sum(user_factors[users] * item_factors[items], axis=1)


if __name__ == "__main__":
    # Small synthetic sizes consistent with the module's __init__.
    n_users, n_items, n_factors = 16, 24, 32
    batch = 8

    key = jax.random.PRNGKey(0)
    k_u, k_i, k_du, k_di = jax.random.split(key, 4)

    # Deterministic parameter init matching uniform_(0, 0.05).
    user_factors = jax.random.uniform(
        k_u, (n_users, n_factors), dtype=jnp.float32, minval=0.0, maxval=0.05)
    item_factors = jax.random.uniform(
        k_i, (n_items, n_factors), dtype=jnp.float32, minval=0.0, maxval=0.05)

    # data[:, 0] = user indices, data[:, 1] = item indices (as in PyTorch forward).
    user_idx = jax.random.randint(k_du, (batch,), 0, n_users, dtype=jnp.int32)
    item_idx = jax.random.randint(k_di, (batch,), 0, n_items, dtype=jnp.int32)
    data = jnp.stack([user_idx, item_idx], axis=1)  # (B, 2) int32

    ref = _reference_forward(data, user_factors, item_factors)

    # Auto path (tiny tables -> VMEM-resident one-hot MXU gather).
    out = matrix_factorization_forward(data, user_factors, item_factors)
    out = jax.block_until_ready(out)
    assert out.shape == (batch,)
    assert jnp.allclose(out, ref, rtol=1e-5, atol=1e-6), (out, ref)

    # Also exercise the DMA-gather path (the primary path for realistic sizes).
    out_dma = matrix_factorization_forward(
        data, user_factors, item_factors, path="dma")
    out_dma = jax.block_until_ready(out_dma)
    assert out_dma.shape == (batch,)
    assert jnp.allclose(out_dma, ref, rtol=1e-5, atol=1e-6), (out_dma, ref)

    print("KERNEL_OK")
</pallas_src>

<mosaic_0001>
module attributes {stable_mosaic.version = 11 : i64} {
  func.func @_mf_onehot_kernel(%arg0: i32, %arg1: memref<1x128xi32, #tpu.memory_space<vmem>>, %arg2: memref<1x128xi32, #tpu.memory_space<vmem>>, %arg3: memref<16x32xf32, #tpu.memory_space<vmem>>, %arg4: memref<24x32xf32, #tpu.memory_space<vmem>>, %arg5: memref<1x128xf32, #tpu.memory_space<vmem>>) attributes {dimension_semantics = [#tpu.dimension_semantics<parallel>], iteration_bounds = array<i64: 1>, scalar_prefetch = 0 : i64, scratch_operands = 0 : i64, tpu.core_type = #tpu.core_type<tc>, window_params = [{transform_indices = @transform_0, window_bounds = array<i64: 1, 128>}, {transform_indices = @transform_1, window_bounds = array<i64: 1, 128>}, {pipeline_mode = #tpu.pipeline_mode<synchronous>, transform_indices = @transform_2, window_bounds = array<i64: 16, 32>}, {pipeline_mode = #tpu.pipeline_mode<synchronous>, transform_indices = @transform_3, window_bounds = array<i64: 24, 32>}, {transform_indices = @transform_4, window_bounds = array<i64: 1, 128>}]} {
    %c0 = arith.constant 0 : index
    %c0_0 = arith.constant 0 : index
    %0 = vector.load %arg1[%c0, %c0_0] : memref<1x128xi32, #tpu.memory_space<vmem>>, vector<1x128xi32>
    %c0_1 = arith.constant 0 : index
    %c0_2 = arith.constant 0 : index
    %1 = vector.load %arg2[%c0_1, %c0_2] : memref<1x128xi32, #tpu.memory_space<vmem>>, vector<1x128xi32>
    %2 = tpu.iota {dimensions = array<i32: 0>} : vector<16x1xi32>
    %3 = vector.broadcast %2 : vector<16x1xi32> to vector<16x128xi32>
    %4 = vector.broadcast %0 : vector<1x128xi32> to vector<16x128xi32>
    %5 = arith.cmpi eq, %3, %4 : vector<16x128xi32>
    %6 = arith.extui %5 : vector<16x128xi1> to vector<16x128xi32>
    %7 = arith.sitofp %6 : vector<16x128xi32> to vector<16x128xf32>
    %8 = tpu.iota {dimensions = array<i32: 0>} : vector<24x1xi32>
    %9 = vector.broadcast %8 : vector<24x1xi32> to vector<24x128xi32>
    %10 = vector.broadcast %1 : vector<1x128xi32> to vector<24x128xi32>
    %11 = arith.cmpi eq, %9, %10 : vector<24x128xi32>
    %12 = arith.extui %11 : vector<24x128xi1> to vector<24x128xi32>
    %13 = arith.sitofp %12 : vector<24x128xi32> to vector<24x128xf32>
    %c0_3 = arith.constant 0 : index
    %c0_4 = arith.constant 0 : index
    %14 = vector.load %arg3[%c0_3, %c0_4] : memref<16x32xf32, #tpu.memory_space<vmem>>, vector<16x32xf32>
    %cst = arith.constant dense<0.000000e+00> : vector<32x128xf32>
    %15 = tpu.matmul %14, %7, %cst {dimension_numbers = #tpu.dot_dimension_numbers<[0], [0], [1], [1], [0, 1, 1, 1], [], []>} : vector<16x32xf32>, vector<16x128xf32>, vector<32x128xf32> -> vector<32x128xf32>
    %c0_5 = arith.constant 0 : index
    %c0_6 = arith.constant 0 : index
    %16 = vector.load %arg4[%c0_5, %c0_6] : memref<24x32xf32, #tpu.memory_space<vmem>>, vector<24x32xf32>
    %cst_7 = arith.constant dense<0.000000e+00> : vector<32x128xf32>
    %17 = tpu.matmul %16, %13, %cst_7 {dimension_numbers = #tpu.dot_dimension_numbers<[0], [0], [1], [1], [0, 1, 1, 1], [], []>} : vector<24x32xf32>, vector<24x128xf32>, vector<32x128xf32> -> vector<32x128xf32>
    %18 = arith.mulf %15, %17 : vector<32x128xf32>
    %cst_8 = arith.constant dense<0.000000e+00> : vector<128xf32>
    %19 = vector.multi_reduction <add>, %18, %cst_8 [0] : vector<32x128xf32> to vector<128xf32>
    %20 = vector.shape_cast %19 : vector<128xf32> to vector<1x128xf32>
    %c0_9 = arith.constant 0 : index
    %c0_10 = arith.constant 0 : index
    %21 = vector.load %arg5[%c0_9, %c0_10] : memref<1x128xf32, #tpu.memory_space<vmem>>, vector<1x128xf32>
    tpu.vector_store %arg5[%c0_9, %c0_10], %20 {strides = array<i32>} : memref<1x128xf32, #tpu.memory_space<vmem>>, vector<1x128xf32>,
    return
  }
  func.func @transform_0(%arg0: i32) -> (i32, i32) {
    %c0_i32 = arith.constant 0 : i32
    %c0_i32_0 = arith.constant 0 : i32
    return %arg0, %c0_i32 : i32, i32
  }
  func.func @transform_1(%arg0: i32) -> (i32, i32) {
    %c0_i32 = arith.constant 0 : i32
    %c0_i32_0 = arith.constant 0 : i32
    return %arg0, %c0_i32 : i32, i32
  }
  func.func @transform_2(%arg0: i32) -> (i32, i32) {
    %c0_i32 = arith.constant 0 : i32
    %c0_i32_0 = arith.constant 0 : i32
    %c0_i32_1 = arith.constant 0 : i32
    return %c0_i32, %c0_i32_0 : i32, i32
  }
  func.func @transform_3(%arg0: i32) -> (i32, i32) {
    %c0_i32 = arith.constant 0 : i32
    %c0_i32_0 = arith.constant 0 : i32
    %c0_i32_1 = arith.constant 0 : i32
    return %c0_i32, %c0_i32_0 : i32, i32
  }
  func.func @transform_4(%arg0: i32) -> (i32, i32) {
    %c0_i32 = arith.constant 0 : i32
    %c0_i32_0 = arith.constant 0 : i32
    return %arg0, %c0_i32 : i32, i32
  }
}

</mosaic_0001>

<llo_original>
// kernel: tpu_custom_call.1
$region0: #{tpu_custom_call.1}
  #allocation0 [shape = 'u32[]', space=smem, size = 0x4, offset = 0x4, fixed_abs, tag = 'smem constant byte address 0x4 - core index']
  #allocation1 [shape = 'u32[144,128]{1,0:T(1,128)}', space=vmem, size = 0x12000, scoped, tag = 'internal scratch']
  %s0 = inlined_call_operand.hbm [shape: s32[1,128], index: 0, kind: input, shape index: {}]
  %s1 = inlined_call_operand.vmem [shape: s32[1,128], index: 1, kind: input, shape index: {}]
  %s2 = inlined_call_operand.hbm [shape: f32[16,32], index: 2, kind: input, shape index: {}]
  %s3 = inlined_call_operand.hbm [shape: f32[24,32], index: 3, kind: input, shape index: {}]
  %s4 = inlined_call_operand.hbm [shape: f32[1,128], index: 4, kind: output, shape index: {}]
  %s5 = sld [smem:[#allocation0]]
  $region38: #{tpu_custom_call.1} parent=0
    _
  %s7 = ssub.s32 1, %s5
  %s8 = scalar_select 0, %s7, %s5
  $region1: #{tpu_custom_call.1} parent=0
    #allocation2 [shape = 'u8[512]{0}', space=vmem, size = 0x400, scoped, tag = 'input window, operand 0, single buffered']
    #allocation3 [shape = 's32[1]{0}', space=sflag, size = 0x4, scoped, tag = 'scoped memory for tpu_custom_call.1']
    #allocation4 [shape = 's32[1]{0}', space=sflag, size = 0x4, scoped, tag = 'scoped memory for tpu_custom_call.1']
    #allocation5 [shape = 'u8[8192]{0}', space=vmem, size = 0x2000, scoped, tag = 'input window, operand 2, single buffered']
    #allocation6 [shape = 's32[1]{0}', space=sflag, size = 0x4, scoped, tag = 'scoped memory for tpu_custom_call.1']
    #allocation7 [shape = 'u8[12288]{0}', space=vmem, size = 0x3000, scoped, tag = 'input window, operand 3, single buffered']
    #allocation8 [shape = 'u8[512]{0}', space=vmem, size = 0x400, scoped, tag = 'output window, operand 0, single buffered']
    %9 = vsyncpa [#allocation3], 0
    %10 = vsyncpa [#allocation6], 0
    %11 = vsyncpa [#allocation4], 0
    // Predicated region
    $region2: #{tpu_custom_call.1} parent=1 // pred_check
      _
    $region3: #{tpu_custom_call.1} parent=1 // pred_check_branch
      %13 = sbr.rel (0) target = $region5
    $region4: #{tpu_custom_call.1} parent=1 // pred_region
      %s15 = ssub.s32 16, 16
      %16 = vsyncadd [#allocation3], %s15
      %s18 = sshll.u32 [#allocation2], 4
      %s19 = int_to_ptr.vmem [resolvable:$true] %s18
      %21 = dma.hbm_to_vmem [thread:$0]  %s0, 16, %s19, [#allocation3]
    $region5: #{tpu_custom_call.1} parent=1 // pred_fallthru
      _
    // Predicated region
    $region6: #{tpu_custom_call.1} parent=1 // pred_check
      _
    $region7: #{tpu_custom_call.1} parent=1 // pred_check_branch
      %23 = sbr.rel (0) target = $region9
    $region8: #{tpu_custom_call.1} parent=1 // pred_region
      _
    $region9: #{tpu_custom_call.1} parent=1 // pred_fallthru
      _
    // Predicated region
    $region10: #{tpu_custom_call.1} parent=1 // pred_check
      _
    $region11: #{tpu_custom_call.1} parent=1 // pred_check_branch
      %25 = sbr.rel (0) target = $region13
    $region12: #{tpu_custom_call.1} parent=1 // pred_region
      %s27 = ssub.s32 256, 256
      %28 = vsyncadd [#allocation6], %s27
      %s29 = sshll.u32 [#allocation5], 4
      %s30 = int_to_ptr.vmem [resolvable:$true] %s29
      %35 = dma.hbm_to_vmem [thread:$0]  %s2, 256, %s30, [#allocation6], 128, 128, 8
    $region13: #{tpu_custom_call.1} parent=1 // pred_fallthru
      _
    // Predicated region
    $region14: #{tpu_custom_call.1} parent=1 // pred_check
      _
    $region15: #{tpu_custom_call.1} parent=1 // pred_check_branch
      %37 = sbr.rel (0) target = $region17
    $region16: #{tpu_custom_call.1} parent=1 // pred_region
      %s39 = ssub.s32 384, 384
      %40 = vsyncadd [#allocation6], %s39
      %s41 = sshll.u32 [#allocation7], 4
      %s42 = int_to_ptr.vmem [resolvable:$true] %s41
      %47 = dma.hbm_to_vmem [thread:$0]  %s3, 384, %s42, [#allocation6], 128, 128, 8
    $region17: #{tpu_custom_call.1} parent=1 // pred_fallthru
      _
    // Predicated region
    $region18: #{tpu_custom_call.1} parent=1 // pred_check
      _
    $region19: #{tpu_custom_call.1} parent=1 // pred_check_branch
      %49 = sbr.rel (0) target = $region21
    $region20: #{tpu_custom_call.1} parent=1 // pred_region
      %50 = dma.done [#allocation3], 16
    $region21: #{tpu_custom_call.1} parent=1 // pred_fallthru
      _
    // Predicated region
    $region22: #{tpu_custom_call.1} parent=1 // pred_check
      _
    $region23: #{tpu_custom_call.1} parent=1 // pred_check_branch
      %52 = sbr.rel (0) target = $region25
    $region24: #{tpu_custom_call.1} parent=1 // pred_region
      %53 = dma.done [#allocation6], 256
    $region25: #{tpu_custom_call.1} parent=1 // pred_fallthru
      _
    // Predicated region
    $region26: #{tpu_custom_call.1} parent=1 // pred_check
      _
    $region27: #{tpu_custom_call.1} parent=1 // pred_check_branch
      %55 = sbr.rel (0) target = $region29
    $region28: #{tpu_custom_call.1} parent=1 // pred_region
      %56 = dma.done [#allocation6], 384
    $region29: #{tpu_custom_call.1} parent=1 // pred_fallthru
      _
    %v57 = vld [vmem:[#allocation2] sm:$0x1]
    %v58 = vld [vmem:[%s1] sm:$0x1]
    %v59 = vlaneseq
    %v60 = vshrl.u32 %v59, 7
    %v61 = vadd.s32 %v60, 8
    %v62 = vlaneseq
    %v63 = vshrl.u32 %v62, 7
    %v64 = vsub.s32 0, %v63
    %v65 = vrot.slane %v57, %v64
    %vm66 = vcmp.eq.s32.totalorder %v60, %v65
    %vm67 = vcmp.eq.s32.totalorder %v61, %v65
    %v68 = vsel %vm66, 1, 0
    %v69 = vsel %vm67, 1, 0
    %v70 = vcvt.s32.f32 %v68
    %v71 = vcvt.s32.f32 %v69
    %v72 = vadd.s32 %v60, 16
    %v73 = vlaneseq
    %v74 = vshrl.u32 %v73, 7
    %v75 = vsub.s32 0, %v74
    %v76 = vrot.slane %v58, %v75
    %vm77 = vcmp.eq.s32.totalorder %v60, %v76
    %vm78 = vcmp.eq.s32.totalorder %v61, %v76
    %vm79 = vcmp.eq.s32.totalorder %v72, %v76
    %v80 = vsel %vm77, 1, 0
    %v81 = vsel %vm78, 1, 0
    %v82 = vsel %vm79, 1, 0
    %v83 = vcvt.s32.f32 %v80
    %v84 = vcvt.s32.f32 %v81
    %v85 = vcvt.s32.f32 %v82
    %v86 = vld [vmem:[#allocation5] sm:$0xff]
    %v87 = vld [vmem:[#allocation5 + $0x8] sm:$0xff]
    %88 = vxpose.xlu0.b32.start [1/16] %v86, 128
    %89 = vxpose.xlu0.b32.cont [2/16] %v87, 128
    %90 = vxpose.xlu0.b32.cont [3/16] 0.0, 128
    %91 = vxpose.xlu0.b32.cont [4/16] 0.0, 128
    %92 = vxpose.xlu0.b32.cont [5/16] 0.0, 128
    %93 = vxpose.xlu0.b32.cont [6/16] 0.0, 128
    %94 = vxpose.xlu0.b32.cont [7/16] 0.0, 128
    %95 = vxpose.xlu0.b32.cont [8/16] 0.0, 128
    %96 = vxpose.xlu0.b32.cont [9/16] 0.0, 128
    %97 = vxpose.xlu0.b32.cont [10/16] 0.0, 128
    %98 = vxpose.xlu0.b32.cont [11/16] 0.0, 128
    %99 = vxpose.xlu0.b32.cont [12/16] 0.0, 128
    %100 = vxpose.xlu0.b32.cont [13/16] 0.0, 128
    %101 = vxpose.xlu0.b32.cont [14/16] 0.0, 128
    %102 = vxpose.xlu0.b32.cont [15/16] 0.0, 128
    %103 = vxpose.xlu0.b32.end [16/16] 0.0, 128
    %v104 = vpop.trf.xlu0
    %v105 = vpop.trf.xlu0
    %v106 = vpop.trf.xlu0
    %v107 = vpop.trf.xlu0
    %v108 = vpop.trf.xlu0
    %v109 = vpop.trf.xlu0
    %v110 = vpop.trf.xlu0
    %v111 = vpop.trf.xlu0
    %v112 = vpop.trf.xlu0
    %v113 = vpop.trf.xlu0
    %v114 = vpop.trf.xlu0
    %v115 = vpop.trf.xlu0
    %v116 = vpop.trf.xlu0
    %v117 = vpop.trf.xlu0
    %v118 = vpop.trf.xlu0
    %v119 = vpop.trf.xlu0
    %vm120 = vcmask 130048
    %v122 = vsel %vm120, %v104, 0
    %v125 = vsel %vm120, %v105, 0
    %v128 = vsel %vm120, %v106, 0
    %v131 = vsel %vm120, %v107, 0
    %133 = vmatprep.subr.mxu0 0.0
    %134 = vmatpush1.msra.mxu0 %v70
    %135 = vmatprep.subr.mxu0 0.0
    %136 = vmatpush1.msra.mxu0 %v71
    %137 = vmatprep.subr.mxu0 0.0
    %138 = vmatpush1.msra.mxu0 0.0
    %139 = vmatprep.subr.mxu0 0.0
    %140 = vmatpush1.msra.mxu0 0.0
    %141 = vmatprep.subr.mxu0 0.0
    %142 = vmatpush1.msra.mxu0 0.0
    %143 = vmatprep.subr.mxu0 0.0
    %144 = vmatpush1.msra.mxu0 0.0
    %145 = vmatprep.subr.mxu0 0.0
    %146 = vmatpush1.msra.mxu0 0.0
    %147 = vmatprep.subr.mxu0 0.0
    %148 = vmatpush1.msra.mxu0 0.0
    %149 = vmatprep.subr.mxu0 0.0
    %150 = vmatpush1.msra.mxu0 0.0
    %151 = vmatprep.subr.mxu0 0.0
    %152 = vmatpush1.msra.mxu0 0.0
    %153 = vmatprep.subr.mxu0 0.0
    %154 = vmatpush1.msra.mxu0 0.0
    %155 = vmatprep.subr.mxu0 0.0
    %156 = vmatpush1.msra.mxu0 0.0
    %157 = vmatprep.subr.mxu0 0.0
    %158 = vmatpush1.msra.mxu0 0.0
    %159 = vmatprep.subr.mxu0 0.0
    %160 = vmatpush1.msra.mxu0 0.0
    %161 = vmatprep.subr.mxu0 0.0
    %162 = vmatpush1.msra.mxu0 0.0
    %163 = vmatprep.subr.mxu0 0.0
    %164 = vmatpush1.msra.mxu0 0.0
    %165 = vmatprep.subr.mxu0 0.0
    %166 = vmatpush1.msra.mxu0 0.0
    %167 = vmatprep.subr.mxu0 0.0
    %168 = vmatpush1.msra.mxu0 0.0
    %169 = vmatprep.subr.mxu0 0.0
    %170 = vmatpush1.msra.mxu0 0.0
    %171 = vmatprep.subr.mxu0 0.0
    %172 = vmatpush1.msra.mxu0 0.0
    %173 = vmatprep.subr.mxu0 0.0
    %174 = vmatpush1.msra.mxu0 0.0
    %175 = vmatprep.subr.mxu0 0.0
    %176 = vmatpush1.msra.mxu0 0.0
    %177 = vmatprep.subr.mxu0 0.0
    %178 = vmatpush1.msra.mxu0 0.0
    %179 = vmatprep.subr.mxu0 0.0
    %180 = vmatpush1.msra.mxu0 0.0
    %181 = vmatprep.subr.mxu0 0.0
    %182 = vmatpush1.msra.mxu0 0.0
    %183 = vmatprep.subr.mxu0 0.0
    %184 = vmatpush1.msra.mxu0 0.0
    %185 = vmatprep.subr.mxu0 0.0
    %186 = vmatpush1.msra.mxu0 0.0
    %187 = vmatprep.subr.mxu0 0.0
    %188 = vmatpush1.msra.mxu0 0.0
    %189 = vmatprep.subr.mxu0 0.0
    %190 = vmatpush1.msra.mxu0 0.0
    %191 = vmatprep.subr.mxu0 0.0
    %192 = vmatpush1.msra.mxu0 0.0
    %193 = vmatprep.subr.mxu0 0.0
    %194 = vmatpush1.msra.mxu0 0.0
    %195 = vmatprep.subr.mxu0 0.0
    %196 = vmatpush1.msra.mxu0 0.0
    %197 = vmatprep.mubr.f32.mxu0 0.0
    %198 = vmatmul.mubr.f32.gmra.mrb[0].mxu0 %v122
    %v199 = vpop.f32.mrb[0].mxu0
    %v200 = vadd.f32 0.0, %v199
    %v201 = vpop.f32.mrb[0].mxu0
    %202 = vmatprep.mubr.f32.mxu0 0.0
    %203 = vmatmul.mubr.f32.gmra.mrb[0].mxu0 %v125
    %v204 = vpop.f32.mrb[0].mxu0
    %v205 = vadd.f32 0.0, %v204
    %v206 = vpop.f32.mrb[0].mxu0
    %207 = vmatprep.mubr.f32.mxu0 0.0
    %208 = vmatmul.mubr.f32.gmra.mrb[0].mxu0 %v128
    %v209 = vpop.f32.mrb[0].mxu0
    %v210 = vadd.f32 0.0, %v209
    %v211 = vpop.f32.mrb[0].mxu0
    %212 = vmatprep.mubr.f32.mxu0 0.0
    %213 = vmatmul.mubr.f32.gmra.mrb[0].mxu0 %v131
    %v214 = vpop.f32.mrb[0].mxu0
    %v215 = vadd.f32 0.0, %v214
    %v216 = vpop.f32.mrb[0].mxu0
    %217 = vdwg.mxu0
    %v218 = vld [vmem:[#allocation7] sm:$0xff]
    %v219 = vld [vmem:[#allocation7 + $0x8] sm:$0xff]
    %v220 = vld [vmem:[#allocation7 + $0x10] sm:$0xff]
    %221 = vxpose.xlu0.b32.start [1/16] %v218, 128
    %222 = vxpose.xlu0.b32.cont [2/16] %v219, 128
    %223 = vxpose.xlu0.b32.cont [3/16] %v220, 128
    %224 = vxpose.xlu0.b32.cont [4/16] 0.0, 128
    %225 = vxpose.xlu0.b32.cont [5/16] 0.0, 128
    %226 = vxpose.xlu0.b32.cont [6/16] 0.0, 128
    %227 = vxpose.xlu0.b32.cont [7/16] 0.0, 128
    %228 = vxpose.xlu0.b32.cont [8/16] 0.0, 128
    %229 = vxpose.xlu0.b32.cont [9/16] 0.0, 128
    %230 = vxpose.xlu0.b32.cont [10/16] 0.0, 128
    %231 = vxpose.xlu0.b32.cont [11/16] 0.0, 128
    %232 = vxpose.xlu0.b32.cont [12/16] 0.0, 128
    %233 = vxpose.xlu0.b32.cont [13/16] 0.0, 128
    %234 = vxpose.xlu0.b32.cont [14/16] 0.0, 128
    %235 = vxpose.xlu0.b32.cont [15/16] 0.0, 128
    %236 = vxpose.xlu0.b32.end [16/16] 0.0, 128
    %v237 = vpop.trf.xlu0
    %v238 = vpop.trf.xlu0
    %v239 = vpop.trf.xlu0
    %v240 = vpop.trf.xlu0
    %v241 = vpop.trf.xlu0
    %v242 = vpop.trf.xlu0
    %v243 = vpop.trf.xlu0
    %v244 = vpop.trf.xlu0
    %v245 = vpop.trf.xlu0
    %v246 = vpop.trf.xlu0
    %v247 = vpop.trf.xlu0
    %v248 = vpop.trf.xlu0
    %v249 = vpop.trf.xlu0
    %v250 = vpop.trf.xlu0
    %v251 = vpop.trf.xlu0
    %v252 = vpop.trf.xlu0
    %vm253 = vcmask 195584
    %v255 = vsel %vm253, %v237, 0
    %v258 = vsel %vm253, %v238, 0
    %v261 = vsel %vm253, %v239, 0
    %v264 = vsel %vm253, %v240, 0
    %266 = vmatprep.subr.mxu0 0.0
    %267 = vmatpush1.msra.mxu0 %v83
    %268 = vmatprep.subr.mxu0 0.0
    %269 = vmatpush1.msra.mxu0 %v84
    %270 = vmatprep.subr.mxu0 0.0
    %271 = vmatpush1.msra.mxu0 %v85
    %272 = vmatprep.subr.mxu0 0.0
    %273 = vmatpush1.msra.mxu0 0.0
    %274 = vmatprep.subr.mxu0 0.0
    %275 = vmatpush1.msra.mxu0 0.0
    %276 = vmatprep.subr.mxu0 0.0
    %277 = vmatpush1.msra.mxu0 0.0
    %278 = vmatprep.subr.mxu0 0.0
    %279 = vmatpush1.msra.mxu0 0.0
    %280 = vmatprep.subr.mxu0 0.0
    %281 = vmatpush1.msra.mxu0 0.0
    %282 = vmatprep.subr.mxu0 0.0
    %283 = vmatpush1.msra.mxu0 0.0
    %284 = vmatprep.subr.mxu0 0.0
    %285 = vmatpush1.msra.mxu0 0.0
    %286 = vmatprep.subr.mxu0 0.0
    %287 = vmatpush1.msra.mxu0 0.0
    %288 = vmatprep.subr.mxu0 0.0
    %289 = vmatpush1.msra.mxu0 0.0
    %290 = vmatprep.subr.mxu0 0.0
    %291 = vmatpush1.msra.mxu0 0.0
    %292 = vmatprep.subr.mxu0 0.0
    %293 = vmatpush1.msra.mxu0 0.0
    %294 = vmatprep.subr.mxu0 0.0
    %295 = vmatpush1.msra.mxu0 0.0
    %296 = vmatprep.subr.mxu0 0.0
    %297 = vmatpush1.msra.mxu0 0.0
    %298 = vmatprep.subr.mxu0 0.0
    %299 = vmatpush1.msra.mxu0 0.0
    %300 = vmatprep.subr.mxu0 0.0
    %301 = vmatpush1.msra.mxu0 0.0
    %302 = vmatprep.subr.mxu0 0.0
    %303 = vmatpush1.msra.mxu0 0.0
    %304 = vmatprep.subr.mxu0 0.0
    %305 = vmatpush1.msra.mxu0 0.0
    %306 = vmatprep.subr.mxu0 0.0
    %307 = vmatpush1.msra.mxu0 0.0
    %308 = vmatprep.subr.mxu0 0.0
    %309 = vmatpush1.msra.mxu0 0.0
    %310 = vmatprep.subr.mxu0 0.0
    %311 = vmatpush1.msra.mxu0 0.0
    %312 = vmatprep.subr.mxu0 0.0
    %313 = vmatpush1.msra.mxu0 0.0
    %314 = vmatprep.subr.mxu0 0.0
    %315 = vmatpush1.msra.mxu0 0.0
    %316 = vmatprep.subr.mxu0 0.0
    %317 = vmatpush1.msra.mxu0 0.0
    %318 = vmatprep.subr.mxu0 0.0
    %319 = vmatpush1.msra.mxu0 0.0
    %320 = vmatprep.subr.mxu0 0.0
    %321 = vmatpush1.msra.mxu0 0.0
    %322 = vmatprep.subr.mxu0 0.0
    %323 = vmatpush1.msra.mxu0 0.0
    %324 = vmatprep.subr.mxu0 0.0
    %325 = vmatpush1.msra.mxu0 0.0
    %326 = vmatprep.subr.mxu0 0.0
    %327 = vmatpush1.msra.mxu0 0.0
    %328 = vmatprep.subr.mxu0 0.0
    %329 = vmatpush1.msra.mxu0 0.0
    %330 = vmatprep.mubr.f32.mxu0 0.0
    %331 = vmatmul.mubr.f32.gmra.mrb[0].mxu0 %v255
    %v332 = vpop.f32.mrb[0].mxu0
    %v333 = vadd.f32 0.0, %v332
    %v334 = vpop.f32.mrb[0].mxu0
    %335 = vmatprep.mubr.f32.mxu0 0.0
    %336 = vmatmul.mubr.f32.gmra.mrb[0].mxu0 %v258
    %v337 = vpop.f32.mrb[0].mxu0
    %v338 = vadd.f32 0.0, %v337
    %v339 = vpop.f32.mrb[0].mxu0
    %340 = vmatprep.mubr.f32.mxu0 0.0
    %341 = vmatmul.mubr.f32.gmra.mrb[0].mxu0 %v261
    %v342 = vpop.f32.mrb[0].mxu0
    %v343 = vadd.f32 0.0, %v342
    %v344 = vpop.f32.mrb[0].mxu0
    %345 = vmatprep.mubr.f32.mxu0 0.0
    %346 = vmatmul.mubr.f32.gmra.mrb[0].mxu0 %v264
    %v347 = vpop.f32.mrb[0].mxu0
    %v348 = vadd.f32 0.0, %v347
    %v349 = vpop.f32.mrb[0].mxu0
    %350 = vdwg.mxu0
    %v351 = vmul.f32 %v200, %v333
    %v352 = vmul.f32 %v205, %v338
    %v353 = vmul.f32 %v210, %v343
    %v354 = vmul.f32 %v215, %v348
    %v355 = vadd.f32 %v351, %v352
    %v356 = vadd.f32 %v355, %v353
    %v357 = vadd.f32 %v356, %v354
    %v358 = vrot.slane %v357, 4
    %v359 = vadd.f32 %v357, %v358
    %v360 = vrot.slane %v359, 2
    %v361 = vadd.f32 %v359, %v360
    %v362 = vrot.slane %v361, 1
    %v363 = vadd.f32 %v361, %v362
    %364 = vst [vmem:[#allocation8] sm:$0x1] %v363
    // Predicated region
    $region30: #{tpu_custom_call.1} parent=1 // pred_check
      _
    $region31: #{tpu_custom_call.1} parent=1 // pred_check_branch
      %366 = sbr.rel (0) target = $region33
    $region32: #{tpu_custom_call.1} parent=1 // pred_region
      %s368 = ssub.s32 16, 16
      %369 = vsyncadd [#allocation4], %s368
      %s371 = sshll.u32 [#allocation8], 4
      %s372 = int_to_ptr.vmem [resolvable:$true] %s371
      %374 = dma.vmem_to_hbm [thread:$0]  %s372, 16, %s4, [#allocation4]
    $region33: #{tpu_custom_call.1} parent=1 // pred_fallthru
      _
    // Predicated region
    $region34: #{tpu_custom_call.1} parent=1 // pred_check
      _
    $region35: #{tpu_custom_call.1} parent=1 // pred_check_branch
      %376 = sbr.rel (0) target = $region37
    $region36: #{tpu_custom_call.1} parent=1 // pred_region
      %377 = dma.done [#allocation4], 16
    $region37: #{tpu_custom_call.1} parent=1 // pred_fallthru
      _
    %378 = vsyncpa [#allocation3], 1
    %379 = vsyncpa [#allocation6], 1
    %380 = vsyncpa [#allocation4], 1

</llo_original>
